<compile_context>
chip_gen: v5e
topology: v5e:2x2
jax: 0.10.0
libtpu: 0.0.40
codegen_flags: <defaults>
</compile_context>

<pallas_src>
import functools

import jax
import jax.numpy as jnp
from jax.experimental import pallas as pl
from jax.experimental.pallas import tpu as pltpu


def _round_up(x, m):
    return (x + m - 1) // m * m


# ----------------------------------------------------------------------------
# Tiled linear (real (M, N, K) grid, f32 accumulator, optional fused activation)
# ----------------------------------------------------------------------------

def _linear_kernel(x_ref, w_ref, b_ref, o_ref, acc_ref, *, activation=None):
    k = pl.program_id(2)

    @pl.when(k == 0)
    def _():
        acc_ref[...] = jnp.zeros_like(acc_ref)

    acc_ref[...] += jnp.dot(x_ref[...], w_ref[...],
                            preferred_element_type=jnp.float32)

    @pl.when(k == pl.num_programs(2) - 1)
    def _():
        y = acc_ref[...] + b_ref[...]
        if activation == "tanh":
            y = jnp.tanh(y)
        o_ref[...] = y


def pallas_linear(x, w_t, b, *, bm=128, bn=128, bk=128, activation=None):
    """x: (M, K), w_t: (K, N), b: (N,) -> act(x @ w_t + b), f32."""
    M, K = x.shape
    N = w_t.shape[1]
    Mp, Kp, Np = _round_up(M, bm), _round_up(K, bk), _round_up(N, bn)
    xp = jnp.pad(x.astype(jnp.float32), ((0, Mp - M), (0, Kp - K)))
    wp = jnp.pad(w_t.astype(jnp.float32), ((0, Kp - K), (0, Np - N)))
    bp = jnp.pad(b.astype(jnp.float32), (0, Np - N)).reshape(1, Np)

    out = pl.pallas_call(
        functools.partial(_linear_kernel, activation=activation),
        out_shape=jax.ShapeDtypeStruct((Mp, Np), jnp.float32),
        grid_spec=pltpu.PrefetchScalarGridSpec(
            num_scalar_prefetch=0,
            grid=(Mp // bm, Np // bn, Kp // bk),
            in_specs=[
                pl.BlockSpec((bm, bk), lambda i, j, k: (i, k)),
                pl.BlockSpec((bk, bn), lambda i, j, k: (k, j)),
                pl.BlockSpec((1, bn), lambda i, j, k: (0, j)),
            ],
            out_specs=pl.BlockSpec((bm, bn), lambda i, j, k: (i, j)),
            scratch_shapes=[pltpu.VMEM((bm, bn), jnp.float32)],
        ),
        compiler_params=pltpu.CompilerParams(
            dimension_semantics=("parallel", "parallel", "arbitrary")),
    )(xp, wp, bp)
    return out[:M, :N]


# ----------------------------------------------------------------------------
# Masked GRU recurrence over D independent "streams" (encoder fwd/bwd, decoder)
# Grid = (stream, time-block); TT time steps per grid iteration.
# ----------------------------------------------------------------------------

def _gru_kernel(gx_ref, lo_ref, hi_ref, h0_ref, whh_t_ref, bhh_ref,
                out_ref, hT_ref, h_sc):
    tb = pl.program_id(1)

    @pl.when(tb == 0)
    def _():
        h_sc[...] = h0_ref[0]

    whh_t = whh_t_ref[0]          # (Hh, 3Hh)
    bhh = bhh_ref[0]              # (1, 3Hh)
    lo = lo_ref[0]                # (B, 1) int32  valid iff lo <= t < hi
    hi = hi_ref[0]                # (B, 1) int32
    Hh = whh_t.shape[0]
    TT = gx_ref.shape[1]

    h = h_sc[...]                 # (B, Hh) carry
    for tt in range(TT):          # unrolled: static indices, one time-block
        gx = gx_ref[0, tt]        # (B, 3Hh)  precomputed x_t @ W_ih^T + b_ih
        tg = tb * TT + tt
        m = ((tg >= lo) & (tg < hi)).astype(jnp.float32)    # (B, 1)
        gh = jnp.dot(h, whh_t, preferred_element_type=jnp.float32) + bhh
        xr, xz, xn = gx[:, :Hh], gx[:, Hh:2 * Hh], gx[:, 2 * Hh:]
        hr, hz, hn = gh[:, :Hh], gh[:, Hh:2 * Hh], gh[:, 2 * Hh:]
        r = jax.nn.sigmoid(xr + hr)
        z = jax.nn.sigmoid(xz + hz)
        n = jnp.tanh(xn + r * hn)
        h_cand = (1.0 - z) * n + z * h
        out_ref[0, tt] = m * h_cand               # zero outputs at padding
        h = m * h_cand + (1.0 - m) * h            # freeze state past length

    h_sc[...] = h

    @pl.when(tb == pl.num_programs(1) - 1)
    def _():
        hT_ref[0] = h


def gru_streams(gates_x, lo, hi, h0, whh_t, bhh, *, tt=8):
    """gates_x: (D, Tp, B, 3Hh); lo/hi: (D, B, 1) int32; h0: (D, B, Hh);
       whh_t: (D, Hh, 3Hh); bhh: (D, 1, 3Hh) -> outputs (D, Tp, B, Hh),
       final hidden (D, B, Hh)."""
    D, Tp, B, G = gates_x.shape
    Hh = G // 3
    assert Tp % tt == 0
    return pl.pallas_call(
        _gru_kernel,
        out_shape=(jax.ShapeDtypeStruct((D, Tp, B, Hh), jnp.float32),
                   jax.ShapeDtypeStruct((D, B, Hh), jnp.float32)),
        grid_spec=pltpu.PrefetchScalarGridSpec(
            num_scalar_prefetch=0,
            grid=(D, Tp // tt),
            in_specs=[
                pl.BlockSpec((1, tt, B, G), lambda d, t: (d, t, 0, 0)),
                pl.BlockSpec((1, B, 1), lambda d, t: (d, 0, 0)),
                pl.BlockSpec((1, B, 1), lambda d, t: (d, 0, 0)),
                pl.BlockSpec((1, B, Hh), lambda d, t: (d, 0, 0)),
                pl.BlockSpec((1, Hh, G), lambda d, t: (d, 0, 0)),
                pl.BlockSpec((1, 1, G), lambda d, t: (d, 0, 0)),
            ],
            out_specs=[
                pl.BlockSpec((1, tt, B, Hh), lambda d, t: (d, t, 0, 0)),
                pl.BlockSpec((1, B, Hh), lambda d, t: (d, 0, 0)),
            ],
            scratch_shapes=[pltpu.VMEM((B, Hh), jnp.float32)],
        ),
        compiler_params=pltpu.CompilerParams(
            dimension_semantics=("parallel", "arbitrary")),
    )(gates_x, lo, hi, h0, whh_t, bhh)


# ----------------------------------------------------------------------------
# Luong "dot" attention over the whole decoder sequence (grid over batch),
# fused with the attentional-hidden projection tanh(W_c [ctx; h]).
# ----------------------------------------------------------------------------

def _attn_kernel(hs_ref, enc_ref, bias_ref, wc_ctx_ref, wc_h_ref,
                 attn_ref, ah_ref):
    hs = hs_ref[0]                # (Td, H) decoder hidden states
    enc = enc_ref[0]              # (S, H)  encoder outputs
    bias = bias_ref[0]            # (1, S)  0 / -1e9 premise mask

    scores = jax.lax.dot_general(  # hs @ enc^T  -> (Td, S), MXU
        hs, enc, (((1,), (1,)), ((), ())),
        preferred_element_type=jnp.float32) + bias
    scores = scores - jnp.max(scores, axis=-1, keepdims=True)
    e = jnp.exp(scores)
    attn = e * pl.reciprocal(jnp.sum(e, axis=-1, keepdims=True), approx=True)
    ctx = jnp.dot(attn, enc, preferred_element_type=jnp.float32)   # (Td, H)

    # tanh([ctx; h] @ W_c^T) with W_c split into resident H x H halves
    # (fused here so ctx never round-trips to HBM; no bias in W_c).
    ah = jnp.tanh(
        jnp.dot(ctx, wc_ctx_ref[...], preferred_element_type=jnp.float32)
        + jnp.dot(hs, wc_h_ref[...], preferred_element_type=jnp.float32))

    attn_ref[0] = attn
    ah_ref[0] = ah


def luong_dot_attention(hs_bm, enc_bm, bias_b1s, wc_ctx_t, wc_h_t):
    """hs_bm: (B, Td, H), enc_bm: (B, S, H), bias_b1s: (B, 1, S),
       wc_ctx_t / wc_h_t: (H, H) transposed halves of W_c
       -> attn (B, Td, S), attn_h (B, Td, H)."""
    B, Td, H = hs_bm.shape
    S = enc_bm.shape[1]
    return pl.pallas_call(
        _attn_kernel,
        out_shape=(jax.ShapeDtypeStruct((B, Td, S), jnp.float32),
                   jax.ShapeDtypeStruct((B, Td, H), jnp.float32)),
        grid_spec=pltpu.PrefetchScalarGridSpec(
            num_scalar_prefetch=0,
            grid=(B,),
            in_specs=[
                pl.BlockSpec((1, Td, H), lambda b: (b, 0, 0)),
                pl.BlockSpec((1, S, H), lambda b: (b, 0, 0)),
                pl.BlockSpec((1, 1, S), lambda b: (b, 0, 0)),
                pl.BlockSpec((H, H), lambda b: (0, 0)),
                pl.BlockSpec((H, H), lambda b: (0, 0)),
            ],
            out_specs=[
                pl.BlockSpec((1, Td, S), lambda b: (b, 0, 0)),
                pl.BlockSpec((1, Td, H), lambda b: (b, 0, 0)),
            ],
        ),
        compiler_params=pltpu.CompilerParams(
            dimension_semantics=("parallel",)),
    )(hs_bm, enc_bm, bias_b1s, wc_ctx_t, wc_h_t)


# ----------------------------------------------------------------------------
# Seq2Seq model (parameter container + forward)
# ----------------------------------------------------------------------------

class Seq2SeqPallas:
    def __init__(self, oov_size, vocab_size, pretrained_w2v, hidden_size,
                 n_layers, key, attn_type='luong', attn_func='dot',
                 dropout=0.2, time_block=8):
        assert attn_type == 'luong' and attn_func == 'dot'
        assert n_layers == 1  # TODO(synk): stacked (n_layers > 1) GRU not implemented
        assert hidden_size % 2 == 0
        self.hidden_size = hidden_size
        self.vocab_size = vocab_size
        self.pretrained_w2v = pretrained_w2v           # (num_pretrained, E)
        self.time_block = time_block
        emb_dim = pretrained_w2v.shape[1]
        Hd = hidden_size // 2
        H = hidden_size

        def nrm(k, shape):
            return 0.1 * jax.random.normal(k, shape, dtype=jnp.float32)

        ks = jax.random.split(key, 16)
        self.trainable_emb = nrm(ks[0], (oov_size, emb_dim))
        # Encoder: bidirectional GRU, hidden = hidden_size // 2 per direction
        self.enc_w_ih_f = nrm(ks[1], (3 * Hd, emb_dim))
        self.enc_w_hh_f = nrm(ks[2], (3 * Hd, Hd))
        self.enc_b_ih_f = nrm(ks[3], (3 * Hd,))
        self.enc_b_hh_f = nrm(ks[4], (3 * Hd,))
        self.enc_w_ih_b = nrm(ks[5], (3 * Hd, emb_dim))
        self.enc_w_hh_b = nrm(ks[6], (3 * Hd, Hd))
        self.enc_b_ih_b = nrm(ks[7], (3 * Hd,))
        self.enc_b_hh_b = nrm(ks[8], (3 * Hd,))
        # Decoder: GRU(hidden_size) + Luong dot attention + output projection
        self.dec_w_ih = nrm(ks[9], (3 * H, emb_dim))
        self.dec_w_hh = nrm(ks[10], (3 * H, H))
        self.dec_b_ih = nrm(ks[11], (3 * H,))
        self.dec_b_hh = nrm(ks[12], (3 * H,))
        self.w_c = nrm(ks[13], (H, 2 * H))             # tanh(W_c [ctx; h])
        self.w_out = nrm(ks[14], (vocab_size, H))
        self.b_out = nrm(ks[15], (vocab_size,))

    def embed_sentence(self, sentence):
        """Mixed pretrained / trainable embedding lookup (plain-JAX glue)."""
        num_pre = self.pretrained_w2v.shape[0]
        oov_mask = sentence >= num_pre
        pre_idx = jnp.where(oov_mask, 0, sentence)
        emb = jnp.take(self.pretrained_w2v, pre_idx, axis=0)
        tr_idx = jnp.where(oov_mask, sentence - num_pre, 0)
        tr_emb = jnp.take(self.trainable_emb, tr_idx, axis=0)
        return jnp.where(oov_mask[..., None], tr_emb, emb)

    def __call__(self, prem, hypo, prem_lengths, hypo_lengths):
        hypo = hypo[:, :-1]
        mask_prem = (prem != 0)

        emb_prem = self.embed_sentence(prem)           # (B, S, E)
        emb_hypo = self.embed_sentence(hypo)           # (B, Td, E)
        # dropout == identity (inference)

        B, S, E = emb_prem.shape
        Td = emb_hypo.shape[1]
        Hd = self.hidden_size // 2
        H = self.hidden_size
        TT = self.time_block

        # ---------------- Encoder: bidirectional masked GRU ----------------
        # Fused fwd+bwd input projection: one pass over the activations.
        x_tm = jnp.transpose(emb_prem, (1, 0, 2)).reshape(S * B, E)
        w_ih_enc = jnp.concatenate([self.enc_w_ih_f, self.enc_w_ih_b], axis=0)
        b_ih_enc = jnp.concatenate([self.enc_b_ih_f, self.enc_b_ih_b], axis=0)
        gx_all = pallas_linear(x_tm, w_ih_enc.T, b_ih_enc).reshape(S, B, 6 * Hd)
        gx_f, gx_b = gx_all[..., :3 * Hd], gx_all[..., 3 * Hd:]

        Sp = _round_up(S, TT)
        pad_t = [(0, Sp - S), (0, 0), (0, 0)]
        gx_f = jnp.pad(gx_f, pad_t)
        gx_b_rev = jnp.pad(jnp.flip(gx_b, axis=0), pad_t)
        gx_enc = jnp.stack([gx_f, gx_b_rev], axis=0)               # (2, Sp, B, 3Hd)

        lens = prem_lengths.astype(jnp.int32)
        lo = jnp.stack([jnp.zeros((B,), jnp.int32), S - lens],
                       axis=0).reshape(2, B, 1)
        hi = jnp.stack([lens, jnp.full((B,), S, jnp.int32)],
                       axis=0).reshape(2, B, 1)
        h0_enc = jnp.zeros((2, B, Hd), jnp.float32)
        whh_enc = jnp.stack([self.enc_w_hh_f.T, self.enc_w_hh_b.T], axis=0)
        bhh_enc = jnp.stack([self.enc_b_hh_f, self.enc_b_hh_b],
                            axis=0).reshape(2, 1, 3 * Hd)

        enc_out, enc_hT = gru_streams(gx_enc, lo, hi, h0_enc,
                                      whh_enc, bhh_enc, tt=TT)
        out_f = enc_out[0, :S]                                     # (S, B, Hd)
        out_b = jnp.flip(enc_out[1, :S], axis=0)                   # (S, B, Hd)
        enc_out_bm = jnp.transpose(
            jnp.concatenate([out_f, out_b], axis=-1), (1, 0, 2))   # (B, S, H)
        h0_dec = jnp.concatenate([enc_hT[0], enc_hT[1]], axis=-1)  # (B, H)

        # ---------------- Decoder GRU (recurrence only) ----------------
        y_tm = jnp.transpose(emb_hypo, (1, 0, 2)).reshape(Td * B, E)
        gx_d = pallas_linear(y_tm, self.dec_w_ih.T,
                             self.dec_b_ih).reshape(Td, B, 3 * H)
        Tdp = _round_up(Td, TT)
        gx_d = jnp.pad(gx_d, [(0, Tdp - Td), (0, 0), (0, 0)])[None]  # (1,Tdp,B,3H)
        lo_d = jnp.zeros((1, B, 1), jnp.int32)
        hi_d = jnp.full((1, B, 1), Td, jnp.int32)
        dec_h, _ = gru_streams(gx_d, lo_d, hi_d, h0_dec[None],
                               self.dec_w_hh.T[None],
                               self.dec_b_hh.reshape(1, 1, 3 * H), tt=TT)
        hs_bm = jnp.transpose(dec_h[0, :Td], (1, 0, 2))            # (B, Td, H)

        # -------- Attention + fused tanh(W_c [ctx; h]) + vocab projection ---
        attn_bias = jnp.where(mask_prem, 0.0, -1e9).astype(
            jnp.float32).reshape(B, 1, S)
        attn, attn_h = luong_dot_attention(
            hs_bm, enc_out_bm, attn_bias,
            self.w_c[:, :H].T, self.w_c[:, H:].T)                  # attn_h: (B,Td,H)

        logits = pallas_linear(attn_h.reshape(B * Td, H),
                               self.w_out.T, self.b_out)           # (B*Td, V)

        dec_out = logits.reshape(B, Td, self.vocab_size)           # (B, Td, V)
        return dec_out, attn                                       # attn: (B, Td, S)


# ----------------------------------------------------------------------------
# Demo
# ----------------------------------------------------------------------------

if __name__ == "__main__":
    key = jax.random.PRNGKey(0)
    k_w2v, k_model, k_prem, k_hypo = jax.random.split(key, 4)

    # Lane/sublane-friendly small sizes: B=8, E=128, H=256 (Hd=128), V=256.
    num_pretrained, oov_size = 224, 32
    vocab_size = num_pretrained + oov_size
    emb_dim, hidden_size, n_layers = 128, 256, 1
    B, prem_len, hypo_len = 8, 12, 11

    pretrained_w2v = 0.1 * jax.random.normal(
        k_w2v, (num_pretrained, emb_dim), dtype=jnp.float32)
    pretrained_w2v = pretrained_w2v.at[0].set(0.0)      # padding row

    model = Seq2SeqPallas(oov_size, vocab_size, pretrained_w2v,
                          hidden_size, n_layers, k_model)

    prem_lengths = jnp.array([12, 5, 9, 3, 12, 7, 1, 10], dtype=jnp.int32)
    hypo_lengths = jnp.array([11, 7, 11, 4, 9, 11, 2, 8], dtype=jnp.int32)

    prem = jax.random.randint(k_prem, (B, prem_len), 1, vocab_size,
                              dtype=jnp.int32)
    hypo = jax.random.randint(k_hypo, (B, hypo_len), 1, vocab_size,
                              dtype=jnp.int32)
    prem = jnp.where(jnp.arange(prem_len)[None, :] < prem_lengths[:, None],
                     prem, 0)
    hypo = jnp.where(jnp.arange(hypo_len)[None, :] < hypo_lengths[:, None],
                     hypo, 0)

    dec_out, attention = model(prem, hypo, prem_lengths, hypo_lengths)
    jax.block_until_ready((dec_out, attention))

    assert dec_out.shape == (B, hypo_len - 1, vocab_size)
    assert attention.shape == (B, hypo_len - 1, prem_len)
    assert bool(jnp.all(jnp.isfinite(dec_out)))
    assert bool(jnp.all(jnp.isfinite(attention)))
    print("KERNEL_OK")
</pallas_src>

<mosaic_0001>
module attributes {stable_mosaic.version = 11 : i64} {
  func.func @_linear_kernel(%arg0: i32, %arg1: i32, %arg2: i32, %arg3: memref<128x128xf32, #tpu.memory_space<vmem>>, %arg4: memref<128x128xf32, #tpu.memory_space<vmem>>, %arg5: memref<1x128xf32, #tpu.memory_space<vmem>>, %arg6: memref<128x128xf32, #tpu.memory_space<vmem>>, %arg7: memref<128x128xf32, #tpu.memory_space<vmem>>) attributes {dimension_semantics = [#tpu.dimension_semantics<parallel>, #tpu.dimension_semantics<parallel>, #tpu.dimension_semantics<arbitrary>], iteration_bounds = array<i64: 1, 6, 1>, scalar_prefetch = 0 : i64, scratch_operands = 1 : i64, tpu.core_type = #tpu.core_type<tc>, window_params = [{transform_indices = @transform_0, window_bounds = array<i64: 128, 128>}, {transform_indices = @transform_1, window_bounds = array<i64: 128, 128>}, {transform_indices = @transform_2, window_bounds = array<i64: 1, 128>}, {transform_indices = @transform_3, window_bounds = array<i64: 128, 128>}]} {
    %c0_i32 = arith.constant 0 : i32
    %0 = arith.cmpi eq, %arg2, %c0_i32 : i32
    %1 = arith.extui %0 : i1 to i32
    %c0_i32_0 = arith.constant 0 : i32
    %2 = arith.cmpi ne, %1, %c0_i32_0 : i32
    scf.if %2 {
      %cst_10 = arith.constant 0.000000e+00 : f32
      %12 = vector.broadcast %cst_10 : f32 to vector<128x128xf32>
      %c0_11 = arith.constant 0 : index
      %c0_12 = arith.constant 0 : index
      %13 = vector.load %arg7[%c0_11, %c0_12] : memref<128x128xf32, #tpu.memory_space<vmem>>, vector<128x128xf32>
      tpu.vector_store %arg7[%c0_11, %c0_12], %12 {strides = array<i32>} : memref<128x128xf32, #tpu.memory_space<vmem>>, vector<128x128xf32>,
    } else {
    }
    %c0 = arith.constant 0 : index
    %c0_1 = arith.constant 0 : index
    %3 = vector.load %arg7[%c0, %c0_1] : memref<128x128xf32, #tpu.memory_space<vmem>>, vector<128x128xf32>
    %c0_2 = arith.constant 0 : index
    %c0_3 = arith.constant 0 : index
    %4 = vector.load %arg3[%c0_2, %c0_3] : memref<128x128xf32, #tpu.memory_space<vmem>>, vector<128x128xf32>
    %c0_4 = arith.constant 0 : index
    %c0_5 = arith.constant 0 : index
    %5 = vector.load %arg4[%c0_4, %c0_5] : memref<128x128xf32, #tpu.memory_space<vmem>>, vector<128x128xf32>
    %cst = arith.constant dense<0.000000e+00> : vector<128x128xf32>
    %6 = tpu.matmul %4, %5, %cst {dimension_numbers = #tpu.dot_dimension_numbers<[1], [0], [0], [1], [0, 0, 1, 1], [], []>} : vector<128x128xf32>, vector<128x128xf32>, vector<128x128xf32> -> vector<128x128xf32>
    %7 = arith.addf %3, %6 : vector<128x128xf32>
    %c0_6 = arith.constant 0 : index
    %c0_7 = arith.constant 0 : index
    %8 = vector.load %arg7[%c0_6, %c0_7] : memref<128x128xf32, #tpu.memory_space<vmem>>, vector<128x128xf32>
    tpu.vector_store %arg7[%c0_6, %c0_7], %7 {strides = array<i32>} : memref<128x128xf32, #tpu.memory_space<vmem>>, vector<128x128xf32>,
    %c0_i32_8 = arith.constant 0 : i32
    %9 = arith.cmpi eq, %arg2, %c0_i32_8 : i32
    %10 = arith.extui %9 : i1 to i32
    %c0_i32_9 = arith.constant 0 : i32
    %11 = arith.cmpi ne, %10, %c0_i32_9 : i32
    scf.if %11 {
      %c0_10 = arith.constant 0 : index
      %c0_11 = arith.constant 0 : index
      %12 = vector.load %arg7[%c0_10, %c0_11] : memref<128x128xf32, #tpu.memory_space<vmem>>, vector<128x128xf32>
      %c0_12 = arith.constant 0 : index
      %c0_13 = arith.constant 0 : index
      %13 = vector.load %arg5[%c0_12, %c0_13] : memref<1x128xf32, #tpu.memory_space<vmem>>, vector<1x128xf32>
      %14 = vector.broadcast %13 : vector<1x128xf32> to vector<128x128xf32>
      %15 = arith.addf %12, %14 : vector<128x128xf32>
      %c0_14 = arith.constant 0 : index
      %c0_15 = arith.constant 0 : index
      %16 = vector.load %arg6[%c0_14, %c0_15] : memref<128x128xf32, #tpu.memory_space<vmem>>, vector<128x128xf32>
      tpu.vector_store %arg6[%c0_14, %c0_15], %15 {strides = array<i32>} : memref<128x128xf32, #tpu.memory_space<vmem>>, vector<128x128xf32>,
    } else {
    }
    return
  }
  func.func @transform_0(%arg0: i32, %arg1: i32, %arg2: i32) -> (i32, i32) {
    %c0_i32 = arith.constant 0 : i32
    return %arg0, %arg2 : i32, i32
  }
  func.func @transform_1(%arg0: i32, %arg1: i32, %arg2: i32) -> (i32, i32) {
    %c0_i32 = arith.constant 0 : i32
    return %arg2, %arg1 : i32, i32
  }
  func.func @transform_2(%arg0: i32, %arg1: i32, %arg2: i32) -> (i32, i32) {
    %c0_i32 = arith.constant 0 : i32
    %c0_i32_0 = arith.constant 0 : i32
    return %c0_i32, %arg1 : i32, i32
  }
  func.func @transform_3(%arg0: i32, %arg1: i32, %arg2: i32) -> (i32, i32) {
    %c0_i32 = arith.constant 0 : i32
    return %arg0, %arg1 : i32, i32
  }
}

</mosaic_0001>

<llo_original>
// kernel: tpu_custom_call.1
$region0: #{tpu_custom_call.1}
  #allocation0 [shape = 'u32[]', space=smem, size = 0x4, offset = 0x4, fixed_abs, tag = 'smem constant byte address 0x4 - core index']
  #allocation1 [shape = 'u32[72,128]{1,0:T(1,128)}', space=vmem, size = 0x9000, scoped, tag = 'internal scratch']
  #allocation2 [shape = 'f32[128,128]{1,0:T(8,128)}', space=vmem, size = 0x10000, scoped, tag = 'scratch operand']
  %s0 = inlined_call_operand.hbm [shape: f32[128,128], index: 0, kind: input, shape index: {}]
  %s1 = inlined_call_operand.hbm [shape: f32[128,768], index: 1, kind: input, shape index: {}]
  %s2 = inlined_call_operand.hbm [shape: f32[1,768], index: 2, kind: input, shape index: {}]
  %s3 = inlined_call_operand.hbm [shape: f32[128,768], index: 3, kind: output, shape index: {}]
  %s4 = sld [smem:[#allocation0]]
  $region65: #{tpu_custom_call.1} parent=0
    _
  %s6 = ssub.s32 1, %s4
  %s7 = scalar_select 0, %s6, %s4
  $region1: #{tpu_custom_call.1} parent=0
    #allocation3 [shape = 'u8[65536]{0}', space=vmem, size = 0x10000, scoped, tag = 'input window, operand 0, single buffered']
    #allocation4 [shape = 's32[2]{0}', space=sflag, size = 0x8, scoped, tag = 'scoped memory for tpu_custom_call.1']
    #allocation5 [shape = 's32[2]{0}', space=sflag, size = 0x8, scoped, tag = 'scoped memory for tpu_custom_call.1']
    #allocation6 [shape = 'u8[131072]{0}', space=vmem, size = 0x20000, scoped, tag = 'input window, operand 1']
    #allocation7 [shape = 's32[2]{0}', space=sflag, size = 0x8, scoped, tag = 'scoped memory for tpu_custom_call.1']
    #allocation8 [shape = 'u8[1024]{0}', space=vmem, size = 0x400, scoped, tag = 'input window, operand 2']
    #allocation9 [shape = 'u8[131072]{0}', space=vmem, size = 0x20000, scoped, tag = 'output window, operand 0']
    %8 = vsyncpa [#allocation4], 0
    %9 = vsyncpa [#allocation7], 0
    %s10 = scalar_lea.sflag [#allocation7], 1
    %11 = vsyncpa %s10, 0
    %12 = vsyncpa [#allocation5], 0
    %s13 = scalar_lea.sflag [#allocation5], 1
    %14 = vsyncpa %s13, 0
    loop: start=0, step=1, limit=8
    $region2: #{tpu_custom_call.1} parent=1 // loop_pre_header
      _
    $region3: #{tpu_custom_call.1} parent=1 // loop_header
      %s16 = sphi 0, %s20
      %p17 = scmp.ge.s32.totalorder %s16, 8
      %s23 = sphi 0, %s42
      %s24 = sphi 0, %s38
      %s25 = sphi 0, %s34
      %s26 = sphi 0, %s23
      %s27 = sphi 0, %s24
      %s28 = sphi 0, %s25
      %s29 = sphi 0, %s26
      %s30 = sphi 0, %s27
      %s31 = sphi 0, %s28
      %s47 = sphi 0, %s49
      %s50 = sphi 0, %s47
      %s51 = sphi 0, %s50
      %s67 = sphi 0, %s51
      %s75 = sphi 0, %s77
      %s78 = sphi 0, %s75
      %s79 = sphi 0, %s78
      %s95 = sphi 0, %s79
      %s101 = sphi 0, %s103
      %s104 = sphi 0, %s101
      %s105 = sphi 0, %s104
      %s121 = sphi 0, %s105
      %s129 = sphi 0, %s131
      %s132 = sphi 0, %s129
      %s133 = sphi 0, %s132
      %s149 = sphi 0, %s133
    $region4: #{tpu_custom_call.1} parent=1 // loop_header_branch
      %19 = sbr.rel (%p17) target = $region8
    $region5: #{tpu_custom_call.1} parent=1 // loop_body
      %s21 = ssub.s32 %s16, 1
      %s22 = ssub.s32 %s16, 2
      %s32 = sadd.s32 1, %s25
      %p33 = scmp.ge.s32.totalorder %s32, 1
      %s34 = scalar_select %p33, 0, %s32
      %s35 = sadd.s32 1, %s24
      %s36 = scalar_select %p33, %s35, %s24
      %p37 = scmp.ge.s32.totalorder %s36, 6
      %s38 = scalar_select %p37, 0, %s36
      %s39 = sadd.s32 1, %s23
      %s40 = scalar_select %p37, %s39, %s23
      %p41 = scmp.ge.s32.totalorder %s40, 1
      %s42 = scalar_select %p41, 0, %s40
      %s43 = ssub.s32 %s23, %s42
      %s44 = ssub.s32 %s25, %s34
      %s45 = sor.u32 %s43, %s44
      %p46 = scmp.eq.s32.totalorder %s45, 0
      %s48 = sadd.s32 %s47, 1
      %s49 = scalar_select %p46, %s47, %s48
      %p52 = pneg %p46
      %p53 = scmp.eq.s32.totalorder %s16, 5
      %p54 = por %p52, %p53
      %p55 = scmp.ne.s32.totalorder %s47, %s50
      %p56 = scmp.eq.s32.totalorder %s16, 0
      %p57 = por %p55, %p56
      %p58 = scmp.ne.s32.totalorder %s47, %s50
      %p59 = scmp.eq.s32.totalorder %s21, 5
      %p60 = por %p58, %p59
      %p61 = scmp.ne.s32.totalorder %s50, %s51
      %p62 = scmp.eq.s32.totalorder %s21, 0
      %p63 = por %p61, %p62
      %p64 = scmp.ne.s32.totalorder %s50, %s51
      %p65 = scmp.eq.s32.totalorder %s22, 5
      %p66 = por %p64, %p65
      %p68 = scmp.ne.s32.totalorder %s51, %s67
      %p69 = scmp.eq.s32.totalorder %s22, 0
      %p70 = por %p68, %p69
      %s71 = ssub.s32 %s25, %s34
      %s72 = ssub.s32 %s24, %s38
      %s73 = sor.u32 %s71, %s72
      %p74 = scmp.eq.s32.totalorder %s73, 0
      %s76 = sadd.s32 %s75, 1
      %s77 = scalar_select %p74, %s75, %s76
      %p80 = pneg %p74
      %p81 = scmp.eq.s32.totalorder %s16, 5
      %p82 = por %p80, %p81
      %p83 = scmp.ne.s32.totalorder %s75, %s78
      %p84 = scmp.eq.s32.totalorder %s16, 0
      %p85 = por %p83, %p84
      %p86 = scmp.ne.s32.totalorder %s75, %s78
      %p87 = scmp.eq.s32.totalorder %s21, 5
      %p88 = por %p86, %p87
      %p89 = scmp.ne.s32.totalorder %s78, %s79
      %p90 = scmp.eq.s32.totalorder %s21, 0
      %p91 = por %p89, %p90
      %p92 = scmp.ne.s32.totalorder %s78, %s79
      %p93 = scmp.eq.s32.totalorder %s22, 5
      %p94 = por %p92, %p93
      %p96 = scmp.ne.s32.totalorder %s79, %s95
      %p97 = scmp.eq.s32.totalorder %s22, 0
      %p98 = por %p96, %p97
      %s99 = ssub.s32 %s24, %s38
      %p100 = scmp.eq.s32.totalorder %s99, 0
      %s102 = sadd.s32 %s101, 1
      %s103 = scalar_select %p100, %s101, %s102
      %p106 = pneg %p100
      %p107 = scmp.eq.s32.totalorder %s16, 5
      %p108 = por %p106, %p107
      %p109 = scmp.ne.s32.totalorder %s101, %s104
      %p110 = scmp.eq.s32.totalorder %s16, 0
      %p111 = por %p109, %p110
      %p112 = scmp.ne.s32.totalorder %s101, %s104
      %p113 = scmp.eq.s32.totalorder %s21, 5
      %p114 = por %p112, %p113
      %p115 = scmp.ne.s32.totalorder %s104, %s105
      %p116 = scmp.eq.s32.totalorder %s21, 0
      %p117 = por %p115, %p116
      %p118 = scmp.ne.s32.totalorder %s104, %s105
      %p119 = scmp.eq.s32.totalorder %s22, 5
      %p120 = por %p118, %p119
      %p122 = scmp.ne.s32.totalorder %s105, %s121
      %p123 = scmp.eq.s32.totalorder %s22, 0
      %p124 = por %p122, %p123
      %s125 = ssub.s32 %s23, %s42
      %s126 = ssub.s32 %s24, %s38
      %s127 = sor.u32 %s125, %s126
      %p128 = scmp.eq.s32.totalorder %s127, 0
      %s130 = sadd.s32 %s129, 1
      %s131 = scalar_select %p128, %s129, %s130
      %p134 = pneg %p128
      %p135 = scmp.eq.s32.totalorder %s16, 5
      %p136 = por %p134, %p135
      %p137 = scmp.ne.s32.totalorder %s129, %s132
      %p138 = scmp.eq.s32.totalorder %s16, 0
      %p139 = por %p137, %p138
      %p140 = scmp.ne.s32.totalorder %s129, %s132
      %p141 = scmp.eq.s32.totalorder %s21, 5
      %p142 = por %p140, %p141
      %p143 = scmp.ne.s32.totalorder %s132, %s133
      %p144 = scmp.eq.s32.totalorder %s21, 0
      %p145 = por %p143, %p144
      %p146 = scmp.ne.s32.totalorder %s132, %s133
      %p147 = scmp.eq.s32.totalorder %s22, 5
      %p148 = por %p146, %p147
      %p150 = scmp.ne.s32.totalorder %s133, %s149
      %p151 = scmp.eq.s32.totalorder %s22, 0
      %p152 = por %p150, %p151
      %p153 = scmp.le.s32.totalorder 1, %s16
      %p154 = scmp.lt.s32.totalorder %s16, 7
      %p155 = pnand %p153, %p154
      %p156 = pneg %p155
      // Predicated region
      $region9: #{tpu_custom_call.1} parent=5 // pred_check
        _
      $region10: #{tpu_custom_call.1} parent=5 // pred_check_branch
        %158 = sbr.rel (%p155) target = $region12
      $region11: #{tpu_custom_call.1} parent=5 // pred_region
        %s159 = ssub.s32 %s16, 1
        // Predicated region
        $region13: #{tpu_custom_call.1} parent=11 // pred_check
          %p160 = pneg %p63
        $region14: #{tpu_custom_call.1} parent=11 // pred_check_branch
          %162 = sbr.rel (%p160) target = $region16
        $region15: #{tpu_custom_call.1} parent=11 // pred_region
          %s163 = smul.u32 16, %s26
          %165 = vsyncadd [#allocation4], 0
          %s166 = sadd.s32 %s28, %s163
          %s167 = smul.addr %s166, 8
          %s168 = scalar_lea.hbm %s0, %s167
          %s169 = sshll.u32 %s168, 4
          %s170 = int_to_ptr.hbm [resolvable:$true] %s169
          %s171 = sshll.u32 [#allocation3], 4
          %s172 = int_to_ptr.vmem [resolvable:$true] %s171
          %177 = dma.hbm_to_vmem [thread:$0]  %s170, 2048, %s172, [#allocation4], 128, 128, 8
        $region16: #{tpu_custom_call.1} parent=11 // pred_fallthru
          _
      $region12: #{tpu_custom_call.1} parent=5 // pred_fallthru
        _
      %p178 = scmp.lt.s32.totalorder %s16, 6
      // Predicated region
      $region17: #{tpu_custom_call.1} parent=5 // pred_check
        %p179 = pneg %p178
      $region18: #{tpu_custom_call.1} parent=5 // pred_check_branch
        %181 = sbr.rel (%p179) target = $region20
      $region19: #{tpu_custom_call.1} parent=5 // pred_region
        // Predicated region
        $region21: #{tpu_custom_call.1} parent=19 // pred_check
          %p182 = pneg %p85
        $region22: #{tpu_custom_call.1} parent=19 // pred_check_branch
          %184 = sbr.rel (%p182) target = $region24
        $region23: #{tpu_custom_call.1} parent=19 // pred_region
          %s185 = sand.u32 %s16, 1
          %s186 = scalar_lea.sflag [#allocation7], %s185
          %s187 = sand.u32 %s75, 1
          %s188 = smul.addr %s187, 128
          %s189 = scalar_lea.vmem [#allocation6], %s188
          %s190 = smul.u32 16, %s25
          %192 = vsyncadd %s186, 0
          %s193 = smul.addr %s190, 6
          %s194 = sadd.s32 %s24, %s193
          %s195 = smul.addr %s194, 8
          %s196 = scalar_lea.hbm %s1, %s195
          %s197 = sshll.u32 %s196, 4
          %s198 = int_to_ptr.hbm [resolvable:$true] %s197
          %s199 = sshll.u32 %s189, 4
          %s200 = int_to_ptr.vmem [resolvable:$true] %s199
          %205 = dma.hbm_to_vmem [thread:$0]  %s198, 2048, %s200, %s186, 768, 128, 8
        $region24: #{tpu_custom_call.1} parent=19 // pred_fallthru
          _
        // Predicated region
        $region25: #{tpu_custom_call.1} parent=19 // pred_check
          %p206 = pneg %p111
        $region26: #{tpu_custom_call.1} parent=19 // pred_check_branch
          %208 = sbr.rel (%p206) target = $region28
        $region27: #{tpu_custom_call.1} parent=19 // pred_region
          %s209 = sand.u32 %s16, 1
          %s210 = scalar_lea.sflag [#allocation7], %s209
          %s211 = sand.u32 %s101, 1
          %s212 = scalar_lea.vmem [#allocation8], %s211
          %214 = vsyncadd %s210, 0
          %s215 = scalar_lea.hbm %s2, %s24
          %s217 = sshll.u32 %s215, 4
          %s218 = int_to_ptr.hbm [resolvable:$true] %s217
          %s219 = sshll.u32 %s212, 4
          %s220 = int_to_ptr.vmem [resolvable:$true] %s219
          %222 = dma.hbm_to_vmem [thread:$0]  %s218, 16, %s220, %s210
        $region28: #{tpu_custom_call.1} parent=19 // pred_fallthru
          _
      $region20: #{tpu_custom_call.1} parent=5 // pred_fallthru
        _
      %p223 = scmp.le.s32.totalorder 1, %s16
      %p224 = scmp.lt.s32.totalorder %s16, 7
      %p225 = pnand %p223, %p224
      %p226 = pneg %p225
      // Predicated region
      $region29: #{tpu_custom_call.1} parent=5 // pred_check
        _
      $region30: #{tpu_custom_call.1} parent=5 // pred_check_branch
        %228 = sbr.rel (%p225) target = $region32
      $region31: #{tpu_custom_call.1} parent=5 // pred_region
        %s229 = ssub.s32 %s16, 1
        // Predicated region
        $region33: #{tpu_custom_call.1} parent=31 // pred_check
          %p230 = pneg %p63
        $region34: #{tpu_custom_call.1} parent=31 // pred_check_branch
          %232 = sbr.rel (%p230) target = $region36
        $region35: #{tpu_custom_call.1} parent=31 // pred_region
          %234 = dma.done [#allocation4], 2048
        $region36: #{tpu_custom_call.1} parent=31 // pred_fallthru
          _
        %s235 = sand.u32 %s21, 1
        %s236 = scalar_lea.sflag [#allocation7], %s235
        %s237 = sand.u32 %s78, 1
        %s238 = smul.addr %s237, 128
        %s239 = scalar_lea.vmem [#allocation6], %s238
        // Predicated region
        $region37: #{tpu_custom_call.1} parent=31 // pred_check
          %p240 = pneg %p91
        $region38: #{tpu_custom_call.1} parent=31 // pred_check_branch
          %242 = sbr.rel (%p240) target = $region40
        $region39: #{tpu_custom_call.1} parent=31 // pred_region
          %244 = dma.done %s236, 2048
        $region40: #{tpu_custom_call.1} parent=31 // pred_fallthru
          _
        %s245 = sand.u32 %s21, 1
        %s246 = scalar_lea.sflag [#allocation7], %s245
        %s247 = sand.u32 %s104, 1
        %s248 = scalar_lea.vmem [#allocation8], %s247
        // Predicated region
        $region41: #{tpu_custom_call.1} parent=31 // pred_check
          %p249 = pneg %p117
        $region42: #{tpu_custom_call.1} parent=31 // pred_check_branch
          %251 = sbr.rel (%p249) target = $region44
        $region43: #{tpu_custom_call.1} parent=31 // pred_region
          %253 = dma.done %s246, 16
        $region44: #{tpu_custom_call.1} parent=31 // pred_fallthru
          _
        %p254 = pneg %p63
        %p255 = pneg %p60
        %s256 = sand.u32 %s21, 1
        %s257 = scalar_lea.sflag [#allocation7], %s256
        %s258 = sand.u32 %s78, 1
        %s259 = smul.addr %s258, 128
        %s260 = scalar_lea.vmem [#allocation6], %s259
        %p261 = pneg %p91
        %p262 = pneg %p88
        %s263 = sand.u32 %s21, 1
        %s264 = scalar_lea.sflag [#allocation7], %s263
        %s265 = sand.u32 %s104, 1
        %s266 = scalar_lea.vmem [#allocation8], %s265
        %p267 = pneg %p117
        %p268 = pneg %p114
        %p269 = pneg %p145
        %p270 = pneg %p142
        %s271 = sand.u32 %s132, 1
        %s272 = scalar_lea.sflag [#allocation5], %s271
        %s273 = sand.u32 %s132, 1
        %s274 = smul.addr %s273, 128
        %s275 = scalar_lea.vmem [#allocation9], %s274
        %s276 = smul.u32 16, %s26
        %s277 = smul.u32 16, %s28
        %s278 = smul.u32 16, %s26
        %p279 = scmp.eq.s32.totalorder %s28, 0
        // Predicated region
        $region45: #{tpu_custom_call.1} parent=31 // pred_check
          %p280 = pneg %p279
        $region46: #{tpu_custom_call.1} parent=31 // pred_check_branch
          %282 = sbr.rel (%p280) target = $region48
        $region47: #{tpu_custom_call.1} parent=31 // pred_region
          %283 = vst [vmem:[#allocation2] sm:$0xff] 0.0
          %284 = vst [vmem:[#allocation2 + $0x8] sm:$0xff] 0.0
          %285 = vst [vmem:[#allocation2 + $0x10] sm:$0xff] 0.0
          %286 = vst [vmem:[#allocation2 + $0x18] sm:$0xff] 0.0
          %287 = vst [vmem:[#allocation2 + $0x20] sm:$0xff] 0.0
          %288 = vst [vmem:[#allocation2 + $0x28] sm:$0xff] 0.0
          %289 = vst [vmem:[#allocation2 + $0x30] sm:$0xff] 0.0
          %290 = vst [vmem:[#allocation2 + $0x38] sm:$0xff] 0.0
          %291 = vst [vmem:[#allocation2 + $0x40] sm:$0xff] 0.0
          %292 = vst [vmem:[#allocation2 + $0x48] sm:$0xff] 0.0
          %293 = vst [vmem:[#allocation2 + $0x50] sm:$0xff] 0.0
          %294 = vst [vmem:[#allocation2 + $0x58] sm:$0xff] 0.0
          %295 = vst [vmem:[#allocation2 + $0x60] sm:$0xff] 0.0
          %296 = vst [vmem:[#allocation2 + $0x68] sm:$0xff] 0.0
          %297 = vst [vmem:[#allocation2 + $0x70] sm:$0xff] 0.0
          %298 = vst [vmem:[#allocation2 + $0x78] sm:$0xff] 0.0
        $region48: #{tpu_custom_call.1} parent=31 // pred_fallthru
          _
        %v299 = vld [vmem:[#allocation2] sm:$0xff]
        %v300 = vld [vmem:[#allocation2 + $0x8] sm:$0xff]
        %v301 = vld [vmem:[#allocation2 + $0x10] sm:$0xff]
        %v302 = vld [vmem:[#allocation2 + $0x18] sm:$0xff]
        %v303 = vld [vmem:[#allocation2 + $0x20] sm:$0xff]
        %v304 = vld [vmem:[#allocation2 + $0x28] sm:$0xff]
        %v305 = vld [vmem:[#allocation2 + $0x30] sm:$0xff]
        %v306 = vld [vmem:[#allocation2 + $0x38] sm:$0xff]
        %v307 = vld [vmem:[#allocation2 + $0x40] sm:$0xff]
        %v308 = vld [vmem:[#allocation2 + $0x48] sm:$0xff]
        %v309 = vld [vmem:[#allocation2 + $0x50] sm:$0xff]
        %v310 = vld [vmem:[#allocation2 + $0x58] sm:$0xff]
        %v311 = vld [vmem:[#allocation2 + $0x60] sm:$0xff]
        %v312 = vld [vmem:[#allocation2 + $0x68] sm:$0xff]
        %v313 = vld [vmem:[#allocation2 + $0x70] sm:$0xff]
        %v314 = vld [vmem:[#allocation2 + $0x78] sm:$0xff]
        %v315 = vld [vmem:[#allocation3] sm:$0xff]
        %v316 = vld [vmem:[#allocation3 + $0x8] sm:$0xff]
        %v317 = vld [vmem:[#allocation3 + $0x10] sm:$0xff]
        %v318 = vld [vmem:[#allocation3 + $0x18] sm:$0xff]
        %v319 = vld [vmem:[#allocation3 + $0x20] sm:$0xff]
        %v320 = vld [vmem:[#allocation3 + $0x28] sm:$0xff]
        %v321 = vld [vmem:[#allocation3 + $0x30] sm:$0xff]
        %v322 = vld [vmem:[#allocation3 + $0x38] sm:$0xff]
        %v323 = vld [vmem:[#allocation3 + $0x40] sm:$0xff]
        %v324 = vld [vmem:[#allocation3 + $0x48] sm:$0xff]
        %v325 = vld [vmem:[#allocation3 + $0x50] sm:$0xff]
        %v326 = vld [vmem:[#allocation3 + $0x58] sm:$0xff]
        %v327 = vld [vmem:[#allocation3 + $0x60] sm:$0xff]
        %v328 = vld [vmem:[#allocation3 + $0x68] sm:$0xff]
        %v329 = vld [vmem:[#allocation3 + $0x70] sm:$0xff]
        %v330 = vld [vmem:[#allocation3 + $0x78] sm:$0xff]
        %v331 = vld [vmem:[%s239] sm:$0xff]
        %v332 = vld [vmem:[%s239 + $0x8] sm:$0xff]
        %v333 = vld [vmem:[%s239 + $0x10] sm:$0xff]
        %v334 = vld [vmem:[%s239 + $0x18] sm:$0xff]
        %v335 = vld [vmem:[%s239 + $0x20] sm:$0xff]
        %v336 = vld [vmem:[%s239 + $0x28] sm:$0xff]
        %v337 = vld [vmem:[%s239 + $0x30] sm:$0xff]
        %v338 = vld [vmem:[%s239 + $0x38] sm:$0xff]
        %v339 = vld [vmem:[%s239 + $0x40] sm:$0xff]
        %v340 = vld [vmem:[%s239 + $0x48] sm:$0xff]
        %v341 = vld [vmem:[%s239 + $0x50] sm:$0xff]
        %v342 = vld [vmem:[%s239 + $0x58] sm:$0xff]
        %v343 = vld [vmem:[%s239 + $0x60] sm:$0xff]
        %v344 = vld [vmem:[%s239 + $0x68] sm:$0xff]
        %v345 = vld [vmem:[%s239 + $0x70] sm:$0xff]
        %v346 = vld [vmem:[%s239 + $0x78] sm:$0xff]
        %347 = vmatpush.msra.mxu0 %v346
        %348 = vmatpush.msra.mxu0 %v345
        %349 = vmatpush.msra.mxu0 %v344
        %350 = vmatpush.msra.mxu0 %v343
        %351 = vmatpush.msra.mxu0 %v342
        %352 = vmatpush.msra.mxu0 %v341
        %353 = vmatpush.msra.mxu0 %v340
        %354 = vmatpush.msra.mxu0 %v339
        %355 = vmatpush.msra.mxu0 %v338
        %356 = vmatpush.msra.mxu0 %v337
        %357 = vmatpush.msra.mxu0 %v336
        %358 = vmatpush.msra.mxu0 %v335
        %359 = vmatpush.msra.mxu0 %v334
        %360 = vmatpush.msra.mxu0 %v333
        %361 = vmatpush.msra.mxu0 %v332
        %362 = vmatpush.msra.mxu0 %v331
        %363 = vmatmul.f32.gmra.mxu0 %v315
        %v364 = vpop.f32.mrf.mxu0
        %v365 = vadd.f32 0.0, %v364
        %366 = vmatmul.f32.gmra.mxu0 %v316
        %v367 = vpop.f32.mrf.mxu0
        %v368 = vadd.f32 0.0, %v367
        %369 = vmatmul.f32.gmra.mxu0 %v317
        %v370 = vpop.f32.mrf.mxu0
        %v371 = vadd.f32 0.0, %v370
        %372 = vmatmul.f32.gmra.mxu0 %v318
        %v373 = vpop.f32.mrf.mxu0
        %v374 = vadd.f32 0.0, %v373
        %375 = vmatmul.f32.gmra.mxu0 %v319
        %v376 = vpop.f32.mrf.mxu0
        %v377 = vadd.f32 0.0, %v376
        %378 = vmatmul.f32.gmra.mxu0 %v320
        %v379 = vpop.f32.mrf.mxu0
        %v380 = vadd.f32 0.0, %v379
        %381 = vmatmul.f32.gmra.mxu0 %v321
        %v382 = vpop.f32.mrf.mxu0
        %v383 = vadd.f32 0.0, %v382
        %384 = vmatmul.f32.gmra.mxu0 %v322
        %v385 = vpop.f32.mrf.mxu0
        %v386 = vadd.f32 0.0, %v385
        %387 = vmatmul.f32.gmra.mxu0 %v323
        %v388 = vpop.f32.mrf.mxu0
        %v389 = vadd.f32 0.0, %v388
        %390 = vmatmul.f32.gmra.mxu0 %v324
        %v391 = vpop.f32.mrf.mxu0
        %v392 = vadd.f32 0.0, %v391
        %393 = vmatmul.f32.gmra.mxu0 %v325
        %v394 = vpop.f32.mrf.mxu0
        %v395 = vadd.f32 0.0, %v394
        %396 = vmatmul.f32.gmra.mxu0 %v326
        %v397 = vpop.f32.mrf.mxu0
        %v398 = vadd.f32 0.0, %v397
        %399 = vmatmul.f32.gmra.mxu0 %v327
        %v400 = vpop.f32.mrf.mxu0
        %v401 = vadd.f32 0.0, %v400
        %402 = vmatmul.f32.gmra.mxu0 %v328
        %v403 = vpop.f32.mrf.mxu0
        %v404 = vadd.f32 0.0, %v403
        %405 = vmatmul.f32.gmra.mxu0 %v329
        %v406 = vpop.f32.mrf.mxu0
        %v407 = vadd.f32 0.0, %v406
        %408 = vmatmul.f32.gmra.mxu0 %v330
        %v409 = vpop.f32.mrf.mxu0
        %v410 = vadd.f32 0.0, %v409
        %411 = vdwg.mxu0
        %v412 = vadd.f32 %v299, %v365
        %v413 = vadd.f32 %v300, %v368
        %v414 = vadd.f32 %v301, %v371
        %v415 = vadd.f32 %v302, %v374
        %v416 = vadd.f32 %v303, %v377
        %v417 = vadd.f32 %v304, %v380
        %v418 = vadd.f32 %v305, %v383
        %v419 = vadd.f32 %v306, %v386
        %v420 = vadd.f32 %v307, %v389
        %v421 = vadd.f32 %v308, %v392
        %v422 = vadd.f32 %v309, %v395
        %v423 = vadd.f32 %v310, %v398
        %v424 = vadd.f32 %v311, %v401
        %v425 = vadd.f32 %v312, %v404
        %v426 = vadd.f32 %v313, %v407
        %v427 = vadd.f32 %v314, %v410
        %428 = vst [vmem:[#allocation2] sm:$0xff] %v412
        %429 = vst [vmem:[#allocation2 + $0x8] sm:$0xff] %v413
        %430 = vst [vmem:[#allocation2 + $0x10] sm:$0xff] %v414
        %431 = vst [vmem:[#allocation2 + $0x18] sm:$0xff] %v415
        %432 = vst [vmem:[#allocation2 + $0x20] sm:$0xff] %v416
        %433 = vst [vmem:[#allocation2 + $0x28] sm:$0xff] %v417
        %434 = vst [vmem:[#allocation2 + $0x30] sm:$0xff] %v418
        %435 = vst [vmem:[#allocation2 + $0x38] sm:$0xff] %v419
        %436 = vst [vmem:[#allocation2 + $0x40] sm:$0xff] %v420
        %437 = vst [vmem:[#allocation2 + $0x48] sm:$0xff] %v421
        %438 = vst [vmem:[#allocation2 + $0x50] sm:$0xff] %v422
        %439 = vst [vmem:[#allocation2 + $0x58] sm:$0xff] %v423
        %440 = vst [vmem:[#allocation2 + $0x60] sm:$0xff] %v424
        %441 = vst [vmem:[#allocation2 + $0x68] sm:$0xff] %v425
        %442 = vst [vmem:[#allocation2 + $0x70] sm:$0xff] %v426
        %443 = vst [vmem:[#allocation2 + $0x78] sm:$0xff] %v427
        // Predicated region
        $region49: #{tpu_custom_call.1} parent=31 // pred_check
          %p444 = pneg %p279
        $region50: #{tpu_custom_call.1} parent=31 // pred_check_branch
          %446 = sbr.rel (%p444) target = $region52
        $region51: #{tpu_custom_call.1} parent=31 // pred_region
          %v447 = vld [vmem:[#allocation2] sm:$0xff]
          %v448 = vld [vmem:[#allocation2 + $0x8] sm:$0xff]
          %v449 = vld [vmem:[#allocation2 + $0x10] sm:$0xff]
          %v450 = vld [vmem:[#allocation2 + $0x18] sm:$0xff]
          %v451 = vld [vmem:[#allocation2 + $0x20] sm:$0xff]
          %v452 = vld [vmem:[#allocation2 + $0x28] sm:$0xff]
          %v453 = vld [vmem:[#allocation2 + $0x30] sm:$0xff]
          %v454 = vld [vmem:[#allocation2 + $0x38] sm:$0xff]
          %v455 = vld [vmem:[#allocation2 + $0x40] sm:$0xff]
          %v456 = vld [vmem:[#allocation2 + $0x48] sm:$0xff]
          %v457 = vld [vmem:[#allocation2 + $0x50] sm:$0xff]
          %v458 = vld [vmem:[#allocation2 + $0x58] sm:$0xff]
          %v459 = vld [vmem:[#allocation2 + $0x60] sm:$0xff]
          %v460 = vld [vmem:[#allocation2 + $0x68] sm:$0xff]
          %v461 = vld [vmem:[#allocation2 + $0x70] sm:$0xff]
          %v462 = vld [vmem:[#allocation2 + $0x78] sm:$0xff]
          %v463 = vld [vmem:[%s248] sm:$0x1]
          %v465 = vperm.slane %v463, 0
          %v467 = vadd.f32 %v447, %v465
          %v468 = vadd.f32 %v448, %v465
          %v469 = vadd.f32 %v449, %v465
          %v470 = vadd.f32 %v450, %v465
          %v471 = vadd.f32 %v451, %v465
          %v472 = vadd.f32 %v452, %v465
          %v473 = vadd.f32 %v453, %v465
          %v474 = vadd.f32 %v454, %v465
          %v475 = vadd.f32 %v455, %v465
          %v476 = vadd.f32 %v456, %v465
          %v477 = vadd.f32 %v457, %v465
          %v478 = vadd.f32 %v458, %v465
          %v479 = vadd.f32 %v459, %v465
          %v480 = vadd.f32 %v460, %v465
          %v481 = vadd.f32 %v461, %v465
          %v482 = vadd.f32 %v462, %v465
          %483 = vst [vmem:[%s275] sm:$0xff] %v467
          %484 = vst [vmem:[%s275 + $0x8] sm:$0xff] %v468
          %485 = vst [vmem:[%s275 + $0x10] sm:$0xff] %v469
          %486 = vst [vmem:[%s275 + $0x18] sm:$0xff] %v470
          %487 = vst [vmem:[%s275 + $0x20] sm:$0xff] %v471
          %488 = vst [vmem:[%s275 + $0x28] sm:$0xff] %v472
          %489 = vst [vmem:[%s275 + $0x30] sm:$0xff] %v473
          %490 = vst [vmem:[%s275 + $0x38] sm:$0xff] %v474
          %491 = vst [vmem:[%s275 + $0x40] sm:$0xff] %v475
          %492 = vst [vmem:[%s275 + $0x48] sm:$0xff] %v476
          %493 = vst [vmem:[%s275 + $0x50] sm:$0xff] %v477
          %494 = vst [vmem:[%s275 + $0x58] sm:$0xff] %v478
          %495 = vst [vmem:[%s275 + $0x60] sm:$0xff] %v479
          %496 = vst [vmem:[%s275 + $0x68] sm:$0xff] %v480
          %497 = vst [vmem:[%s275 + $0x70] sm:$0xff] %v481
          %498 = vst [vmem:[%s275 + $0x78] sm:$0xff] %v482
        $region52: #{tpu_custom_call.1} parent=31 // pred_fallthru
          _
        %s499 = sand.u32 %s132, 1
        %s500 = scalar_lea.sflag [#allocation5], %s499
        %s501 = sand.u32 %s132, 1
        %s502 = smul.addr %s501, 128
        %s503 = scalar_lea.vmem [#allocation9], %s502
        // Predicated region
        $region53: #{tpu_custom_call.1} parent=31 // pred_check
          %p504 = pneg %p142
        $region54: #{tpu_custom_call.1} parent=31 // pred_check_branch
          %506 = sbr.rel (%p504) target = $region56
        $region55: #{tpu_custom_call.1} parent=31 // pred_region
          %s507 = smul.u32 16, %s26
          %509 = vsyncadd %s500, 0
          %s510 = smul.addr %s507, 6
          %s511 = sadd.s32 %s27, %s510
          %s512 = smul.addr %s511, 8
          %s513 = scalar_lea.hbm %s3, %s512
          %s514 = sshll.u32 %s503, 4
          %s515 = int_to_ptr.vmem [resolvable:$true] %s514
          %s516 = sshll.u32 %s513, 4
          %s517 = int_to_ptr.hbm [resolvable:$true] %s516
          %522 = dma.vmem_to_hbm [thread:$0]  %s515, 2048, %s517, %s500, 128, 768, 8
        $region56: #{tpu_custom_call.1} parent=31 // pred_fallthru
          _
      $region32: #{tpu_custom_call.1} parent=5 // pred_fallthru
        _
      %p523 = scmp.le.s32.totalorder 2, %s16
      // Predicated region
      $region57: #{tpu_custom_call.1} parent=5 // pred_check
        %p524 = pneg %p523
      $region58: #{tpu_custom_call.1} parent=5 // pred_check_branch
        %526 = sbr.rel (%p524) target = $region60
      $region59: #{tpu_custom_call.1} parent=5 // pred_region
        %s527 = ssub.s32 %s16, 2
        // Predicated region
        $region61: #{tpu_custom_call.1} parent=59 // pred_check
          %p528 = pneg %p148
        $region62: #{tpu_custom_call.1} parent=59 // pred_check_branch
          %530 = sbr.rel (%p528) target = $region64
        $region63: #{tpu_custom_call.1} parent=59 // pred_region
          %s531 = sand.u32 %s133, 1
          %s532 = scalar_lea.sflag [#allocation5], %s531
          %s533 = sand.u32 %s133, 1
          %s534 = smul.addr %s533, 128
          %s535 = scalar_lea.vmem [#allocation9], %s534
          %537 = dma.done %s532, 2048
        $region64: #{tpu_custom_call.1} parent=59 // pred_fallthru
          _
      $region60: #{tpu_custom_call.1} parent=5 // pred_fallthru
        _
    $region6: #{tpu_custom_call.1} parent=1 // loop_footer
      %s20 = sadd.s32 1, %s16
    $region7: #{tpu_custom_call.1} parent=1 // loop_footer_branch
      %15 = sbr.rel target = $region3
    $region8: #{tpu_custom_call.1} parent=1 // loop_exit
      _
    %538 = vsyncpa [#allocation4], 1
    %s539 = scalar_lea.sflag [#allocation4], 1
    %540 = vsyncpa %s539, 1
    %541 = vsyncpa [#allocation7], 1
    %s542 = scalar_lea.sflag [#allocation7], 1
    %543 = vsyncpa %s542, 1
    %544 = vsyncpa [#allocation5], 1
    %s545 = scalar_lea.sflag [#allocation5], 1
    %546 = vsyncpa %s545, 1

</llo_original>
